<compile_context>
chip_gen: v7x
topology: tpu7x:2x2x1
jax: 0.10.0
libtpu: 0.0.40
codegen_flags: <defaults>
</compile_context>

<pallas_src>
import functools

import jax
import jax.numpy as jnp
from jax.experimental import pallas as pl
from jax.experimental.pallas import tpu as pltpu

LATENT_SIZE = 32


def _round_up(x, m):
    return ((x + m - 1) // m) * m


def _cdiv(a, b):
    return -(-a // b)


# ----------------------------- Pallas kernel --------------------------------
def _edge_mlp_kernel(x_ref, w1t_ref, b1_ref, w2t_ref, b2_ref, out_ref):
    """One lane-dense edge tile (features on sublanes, edges on lanes).

    x_ref  : [F_pad, TILE_E]  fused per-edge features (edge|sender|receiver)
    w1t_ref: [H, F_pad]       W1 row-block, transposed (zero cols for padding)
    b1_ref : [H, 1]           first bias (+ folded global-attr contribution)
    w2t_ref: [O, H]
    b2_ref : [O, 1]
    out_ref: [O, TILE_E]
    """
    h = jnp.dot(w1t_ref[...], x_ref[...], preferred_element_type=jnp.float32)
    h = jnp.maximum(h + b1_ref[...], 0.0)                 # bias + ReLU
    y = jnp.dot(w2t_ref[...], h, preferred_element_type=jnp.float32)
    y = y + b2_ref[...]
    out_ref[...] = y.astype(out_ref.dtype)


def edge_mlp_transposed(x_slab, w1t, b1_col, w2t, b2_col, out_dtype,
                        *, tile_edges=16384):
    """Apply the EdgeBlock MLP.  Inputs/outputs are edge-on-lane transposed.

    x_slab: [F_pad, E] fused feature slab.  Returns [O, E].
    """
    F_pad, E = x_slab.shape
    H = w2t.shape[1]
    O = w2t.shape[0]
    in_bytes = jnp.dtype(x_slab.dtype).itemsize
    out_bytes = jnp.dtype(out_dtype).itemsize

    # ---- tile selection -----------------------------------------------------
    tile_max = max(128, _round_up(int(tile_edges), 128))

    # Cap the tile by an explicit VMEM budget so the kernel fits comfortably on
    # every generation (v5e: 16 MiB scoped default, v7x: 64 MiB physical):
    #   double-buffered input + output blocks, plus the f32 [H, tile]
    #   intermediate (with slack for a second temporary).
    per_lane_bytes = 2 * (F_pad * in_bytes + O * out_bytes) + 3 * H * 4
    vmem_budget = 24 << 20
    tile_cap = max(128, (vmem_budget // per_lane_bytes) // 128 * 128)
    tile_max = min(tile_max, tile_cap)

    # Split E into near-equal 128-aligned tiles: padding waste is bounded by
    # <~128 lanes per tile, and a long edge list keeps >= 2 grid steps so the
    # "parallel" grid axis shards across both TensorCores on v7x.
    n_tiles = max(1, _cdiv(E, tile_max))
    tile = min(tile_max, _round_up(_cdiv(E, n_tiles), 128))
    grid_len = _cdiv(E, tile)
    E_pad = grid_len * tile

    if E_pad != E:
        x_slab = jnp.pad(x_slab, ((0, 0), (0, E_pad - E)))

    # ---- pallas_call --------------------------------------------------------
    in_specs = [
        pl.BlockSpec((F_pad, tile), lambda i: (0, i)),   # feature slab (streamed)
        pl.BlockSpec((H, F_pad), lambda i: (0, 0)),      # W1^T  (constant block)
        pl.BlockSpec((H, 1), lambda i: (0, 0)),          # b1 (+ globals)
        pl.BlockSpec((O, H), lambda i: (0, 0)),          # W2^T
        pl.BlockSpec((O, 1), lambda i: (0, 0)),          # b2
    ]

    cost = pl.CostEstimate(
        flops=2 * E_pad * (F_pad * H + H * O),
        transcendentals=0,
        bytes_accessed=(E_pad * (F_pad * in_bytes + O * out_bytes)
                        + 4 * (F_pad * H + H * O + H + O)),
    )

    # Enough for the double-buffered blocks + intermediates, capped at 32 MiB
    # (the scoped default on v6e/v7x; raising above v5e's 16 MiB default is
    # fine since its physical VMEM is 128 MiB).
    vmem_limit = int(min(32 << 20, max(16 << 20, 2 * per_lane_bytes * tile)))

    out = pl.pallas_call(
        _edge_mlp_kernel,
        out_shape=jax.ShapeDtypeStruct((O, E_pad), out_dtype),
        grid_spec=pltpu.PrefetchScalarGridSpec(
            num_scalar_prefetch=0,
            grid=(grid_len,),
            in_specs=in_specs,
            out_specs=pl.BlockSpec((O, tile), lambda i: (0, i)),
        ),
        compiler_params=pltpu.CompilerParams(
            dimension_semantics=("parallel",),
            vmem_limit_bytes=vmem_limit),
        cost_estimate=cost,
    )(x_slab, w1t, b1_col, w2t, b2_col)

    return out[:, :E]


# --------------------------- EdgeBlock forward -------------------------------
def edge_block_forward(node_attr, edge_index, edge_attr, global_attr, params,
                       use_edges=True, use_sender_nodes=True,
                       use_receiver_nodes=True, use_globals=True,
                       tile_edges=16384, stream_dtype=None):
    """Functional equivalent of EdgeBlock.forward (non-recurrent MLP path).

    stream_dtype: optionally (e.g. jnp.bfloat16 on v6e/v7x) down-cast the
      streamed feature slab and W1 block; dots still accumulate in f32.
    """
    if not (use_edges or use_sender_nodes or use_receiver_nodes or use_globals):
        raise ValueError("At least one of use_edges/use_sender_nodes/"
                         "use_receiver_nodes/use_globals must be True.")

    senders_idx, receivers_idx = edge_index[0], edge_index[1]
    E = edge_index.shape[1]
    w1, b1, w2, b2 = params["w1"], params["b1"], params["w2"], params["b2"]
    H, O = w1.shape[1], w2.shape[1]
    out_dtype = edge_attr.dtype if edge_attr is not None else node_attr.dtype

    node_t = node_attr.T                                   # [node_dim, N]

    # Split W1 into row blocks matching the (implicit) concat order
    # [edges | senders | receivers | globals]; build transposed feature pieces.
    pieces, w1_rows = [], []
    row = 0

    def take_w1(d):
        nonlocal row
        blk = w1[row:row + d, :]
        row += d
        return blk

    if use_edges:
        pieces.append(edge_attr.T)                         # [edge_dim, E]
        w1_rows.append(take_w1(edge_attr.shape[1]))
    if use_sender_nodes:
        pieces.append(node_t[:, senders_idx])              # [node_dim, E]
        w1_rows.append(take_w1(node_attr.shape[1]))
    if use_receiver_nodes:
        pieces.append(node_t[:, receivers_idx])            # [node_dim, E]
        w1_rows.append(take_w1(node_attr.shape[1]))

    b1_eff = b1
    if use_globals:
        w1g = take_w1(global_attr.shape[1])                # [global_dim, H]
        b1_eff = b1 + (global_attr @ w1g)[0]               # fold into bias

    if not pieces:
        # Only globals: identical result for every edge — no kernel needed.
        y = jnp.maximum(b1_eff, 0.0) @ w2 + b2
        return jnp.broadcast_to(y, (E, O)).astype(out_dtype)

    # Fuse pieces into one slab; pad feature dim to a multiple of 8 sublanes
    # (zero feature rows + zero W1 rows -> identical result, full vreg packing).
    x_slab = jnp.concatenate(pieces, axis=0)               # [F, E]
    w1_blk = jnp.concatenate(w1_rows, axis=0)              # [F, H]
    F = x_slab.shape[0]
    F_pad = _round_up(F, 8)
    if F_pad != F:
        x_slab = jnp.pad(x_slab, ((0, F_pad - F), (0, 0)))
        w1_blk = jnp.pad(w1_blk, ((0, F_pad - F), (0, 0)))

    w1t = w1_blk.T                                         # [H, F_pad]
    if stream_dtype is not None:
        x_slab = x_slab.astype(stream_dtype)
        w1t = w1t.astype(stream_dtype)

    b1_col = b1_eff.reshape(H, 1).astype(jnp.float32)
    w2t = w2.T.astype(jnp.float32)                         # [O, H]
    b2_col = b2.reshape(O, 1).astype(jnp.float32)

    out_t = edge_mlp_transposed(x_slab, w1t, b1_col, w2t, b2_col,
                                out_dtype, tile_edges=tile_edges)
    return out_t.T                                         # [E, O]


# ------------------------------ reference ------------------------------------
def edge_block_reference(node_attr, edge_index, edge_attr, global_attr, params):
    senders_idx, receivers_idx = edge_index[0], edge_index[1]
    num_edges = edge_attr.shape[0]
    collected = jnp.concatenate([
        edge_attr,
        node_attr[senders_idx, :],
        node_attr[receivers_idx, :],
        jnp.broadcast_to(global_attr, (num_edges, global_attr.shape[1])),
    ], axis=-1)
    h = jnp.maximum(collected @ params["w1"] + params["b1"], 0.0)
    return h @ params["w2"] + params["b2"]


# --------------------------------- main ---------------------------------------
if __name__ == "__main__":
    key = jax.random.PRNGKey(0)
    (k_node, k_edge, k_glob, k_idx_s, k_idx_r,
     k_w1, k_b1, k_w2, k_b2) = jax.random.split(key, 9)

    # Small synthetic graph.
    num_nodes = 16
    num_edges = 64
    node_dim = 4
    edge_dim = 4
    global_dim = 4
    in_features = edge_dim + node_dim + node_dim + global_dim   # = 16
    out_features = 4

    node_attr = jax.random.normal(k_node, (num_nodes, node_dim), jnp.float32)
    edge_attr = jax.random.normal(k_edge, (num_edges, edge_dim), jnp.float32)
    global_attr = jax.random.normal(k_glob, (1, global_dim), jnp.float32)
    senders_idx = jax.random.randint(k_idx_s, (num_edges,), 0, num_nodes)
    receivers_idx = jax.random.randint(k_idx_r, (num_edges,), 0, num_nodes)
    edge_index = jnp.stack([senders_idx, receivers_idx], axis=0)  # [2, E]

    # Deterministic parameter init (nn.Linear shapes, stored as [in, out]).
    params = {
        "w1": jax.random.normal(k_w1, (in_features, LATENT_SIZE), jnp.float32)
              * (1.0 / jnp.sqrt(in_features)),
        "b1": jax.random.normal(k_b1, (LATENT_SIZE,), jnp.float32) * 0.01,
        "w2": jax.random.normal(k_w2, (LATENT_SIZE, out_features), jnp.float32)
              * (1.0 / jnp.sqrt(LATENT_SIZE)),
        "b2": jax.random.normal(k_b2, (out_features,), jnp.float32) * 0.01,
    }

    fwd = jax.jit(functools.partial(edge_block_forward))
    out = fwd(node_attr, edge_index, edge_attr, global_attr, params)
    out = jax.block_until_ready(out)

    ref = edge_block_reference(node_attr, edge_index, edge_attr, global_attr,
                               params)
    assert out.shape == (num_edges, out_features)
    assert jnp.allclose(out, ref, atol=1e-4, rtol=1e-4), "mismatch vs reference"

    print("KERNEL_OK")
</pallas_src>

<mosaic_0001>
module attributes {stable_mosaic.version = 11 : i64} {
  func.func @_edge_mlp_kernel(%arg0: i32, %arg1: memref<16x128xf32, #tpu.memory_space<vmem>>, %arg2: memref<32x16xf32, #tpu.memory_space<vmem>>, %arg3: memref<32x1xf32, #tpu.memory_space<vmem>>, %arg4: memref<4x32xf32, #tpu.memory_space<vmem>>, %arg5: memref<4x1xf32, #tpu.memory_space<vmem>>, %arg6: memref<4x128xf32, #tpu.memory_space<vmem>>) attributes {dimension_semantics = [#tpu.dimension_semantics<parallel>], iteration_bounds = array<i64: 1>, scalar_prefetch = 0 : i64, scratch_operands = 0 : i64, tpu.core_type = #tpu.core_type<tc>, window_params = [{transform_indices = @transform_0, window_bounds = array<i64: 16, 128>}, {pipeline_mode = #tpu.pipeline_mode<synchronous>, transform_indices = @transform_1, window_bounds = array<i64: 32, 16>}, {pipeline_mode = #tpu.pipeline_mode<synchronous>, transform_indices = @transform_2, window_bounds = array<i64: 32, 1>}, {pipeline_mode = #tpu.pipeline_mode<synchronous>, transform_indices = @transform_3, window_bounds = array<i64: 4, 32>}, {pipeline_mode = #tpu.pipeline_mode<synchronous>, transform_indices = @transform_4, window_bounds = array<i64: 4, 1>}, {transform_indices = @transform_5, window_bounds = array<i64: 4, 128>}]} {
    %c0 = arith.constant 0 : index
    %c0_0 = arith.constant 0 : index
    %0 = vector.load %arg2[%c0, %c0_0] : memref<32x16xf32, #tpu.memory_space<vmem>>, vector<32x16xf32>
    %c0_1 = arith.constant 0 : index
    %c0_2 = arith.constant 0 : index
    %1 = vector.load %arg1[%c0_1, %c0_2] : memref<16x128xf32, #tpu.memory_space<vmem>>, vector<16x128xf32>
    %cst = arith.constant dense<0.000000e+00> : vector<32x128xf32>
    %2 = tpu.matmul %0, %1, %cst {dimension_numbers = #tpu.dot_dimension_numbers<[1], [0], [0], [1], [0, 0, 1, 1], [], []>} : vector<32x16xf32>, vector<16x128xf32>, vector<32x128xf32> -> vector<32x128xf32>
    %c0_3 = arith.constant 0 : index
    %c0_4 = arith.constant 0 : index
    %3 = vector.load %arg3[%c0_3, %c0_4] : memref<32x1xf32, #tpu.memory_space<vmem>>, vector<32x1xf32>
    %4 = vector.broadcast %3 : vector<32x1xf32> to vector<32x128xf32>
    %5 = arith.addf %2, %4 : vector<32x128xf32>
    %cst_5 = arith.constant 0.000000e+00 : f32
    %6 = vector.broadcast %cst_5 : f32 to vector<32x128xf32>
    %7 = arith.maximumf %5, %6 : vector<32x128xf32>
    %c0_6 = arith.constant 0 : index
    %c0_7 = arith.constant 0 : index
    %8 = vector.load %arg4[%c0_6, %c0_7] : memref<4x32xf32, #tpu.memory_space<vmem>>, vector<4x32xf32>
    %cst_8 = arith.constant dense<0.000000e+00> : vector<4x128xf32>
    %9 = tpu.matmul %8, %7, %cst_8 {dimension_numbers = #tpu.dot_dimension_numbers<[1], [0], [0], [1], [0, 0, 1, 1], [], []>} : vector<4x32xf32>, vector<32x128xf32>, vector<4x128xf32> -> vector<4x128xf32>
    %c0_9 = arith.constant 0 : index
    %c0_10 = arith.constant 0 : index
    %10 = vector.load %arg5[%c0_9, %c0_10] : memref<4x1xf32, #tpu.memory_space<vmem>>, vector<4x1xf32>
    %11 = vector.broadcast %10 : vector<4x1xf32> to vector<4x128xf32>
    %12 = arith.addf %9, %11 : vector<4x128xf32>
    %c0_11 = arith.constant 0 : index
    %c0_12 = arith.constant 0 : index
    %13 = vector.load %arg6[%c0_11, %c0_12] : memref<4x128xf32, #tpu.memory_space<vmem>>, vector<4x128xf32>
    tpu.vector_store %arg6[%c0_11, %c0_12], %12 {strides = array<i32>} : memref<4x128xf32, #tpu.memory_space<vmem>>, vector<4x128xf32>,
    return
  }
  func.func @transform_0(%arg0: i32) -> (i32, i32) {
    %c0_i32 = arith.constant 0 : i32
    %c0_i32_0 = arith.constant 0 : i32
    return %c0_i32, %arg0 : i32, i32
  }
  func.func @transform_1(%arg0: i32) -> (i32, i32) {
    %c0_i32 = arith.constant 0 : i32
    %c0_i32_0 = arith.constant 0 : i32
    %c0_i32_1 = arith.constant 0 : i32
    return %c0_i32, %c0_i32_0 : i32, i32
  }
  func.func @transform_2(%arg0: i32) -> (i32, i32) {
    %c0_i32 = arith.constant 0 : i32
    %c0_i32_0 = arith.constant 0 : i32
    %c0_i32_1 = arith.constant 0 : i32
    return %c0_i32, %c0_i32_0 : i32, i32
  }
  func.func @transform_3(%arg0: i32) -> (i32, i32) {
    %c0_i32 = arith.constant 0 : i32
    %c0_i32_0 = arith.constant 0 : i32
    %c0_i32_1 = arith.constant 0 : i32
    return %c0_i32, %c0_i32_0 : i32, i32
  }
  func.func @transform_4(%arg0: i32) -> (i32, i32) {
    %c0_i32 = arith.constant 0 : i32
    %c0_i32_0 = arith.constant 0 : i32
    %c0_i32_1 = arith.constant 0 : i32
    return %c0_i32, %c0_i32_0 : i32, i32
  }
  func.func @transform_5(%arg0: i32) -> (i32, i32) {
    %c0_i32 = arith.constant 0 : i32
    %c0_i32_0 = arith.constant 0 : i32
    return %c0_i32, %arg0 : i32, i32
  }
}

</mosaic_0001>

<llo_original>
// kernel: edge_block_forward.1
$region0: #{edge_block_forward.1}
  #allocation0 [shape = 'u32[]', space=smem, size = 0x4, offset = 0x4, fixed_abs, tag = 'smem constant byte address 0x4 - core index']
  #allocation1 [shape = 'u32[144,128]{1,0:T(1,128)}', space=vmem, size = 0x12000, scoped, tag = 'internal scratch']
  %s0 = inlined_call_operand.vmem [shape: f32[16,128], index: 0, kind: input, shape index: {}]
  %s1 = inlined_call_operand.vmem [shape: f32[32,16], index: 1, kind: input, shape index: {}]
  %s2 = inlined_call_operand.vmem [shape: f32[32,1], index: 2, kind: input, shape index: {}]
  %s3 = inlined_call_operand.vmem [shape: f32[4,32], index: 3, kind: input, shape index: {}]
  %s4 = inlined_call_operand.vmem [shape: f32[4,1], index: 4, kind: input, shape index: {}]
  %s5 = inlined_call_operand.vmem [shape: f32[4,128], index: 5, kind: output, shape index: {}]
  %s6 = sld [smem:[#allocation0]]
  $region30: #{edge_block_forward.1} parent=0
    _
  %s8 = ssub.s32 1, %s6
  %s9 = scalar_select 0, %s8, %s6
  // Predicated region
  $region2: #{edge_block_forward.1} parent=0 // pred_check
    _
  $region3: #{edge_block_forward.1} parent=0 // pred_check_branch
    %11 = sbr.rel (0) target = $region5
  $region4: #{edge_block_forward.1} parent=0 // pred_region
    _
  $region5: #{edge_block_forward.1} parent=0 // pred_fallthru
    _
  // Predicated region
  $region6: #{edge_block_forward.1} parent=0 // pred_check
    _
  $region7: #{edge_block_forward.1} parent=0 // pred_check_branch
    %13 = sbr.rel (0) target = $region9
  $region8: #{edge_block_forward.1} parent=0 // pred_region
    _
  $region9: #{edge_block_forward.1} parent=0 // pred_fallthru
    _
  // Predicated region
  $region10: #{edge_block_forward.1} parent=0 // pred_check
    _
  $region11: #{edge_block_forward.1} parent=0 // pred_check_branch
    %15 = sbr.rel (0) target = $region13
  $region12: #{edge_block_forward.1} parent=0 // pred_region
    _
  $region13: #{edge_block_forward.1} parent=0 // pred_fallthru
    _
  // Predicated region
  $region14: #{edge_block_forward.1} parent=0 // pred_check
    _
  $region15: #{edge_block_forward.1} parent=0 // pred_check_branch
    %17 = sbr.rel (0) target = $region17
  $region16: #{edge_block_forward.1} parent=0 // pred_region
    _
  $region17: #{edge_block_forward.1} parent=0 // pred_fallthru
    _
  // Predicated region
  $region18: #{edge_block_forward.1} parent=0 // pred_check
    _
  $region19: #{edge_block_forward.1} parent=0 // pred_check_branch
    %19 = sbr.rel (0) target = $region21
  $region20: #{edge_block_forward.1} parent=0 // pred_region
    _
  $region21: #{edge_block_forward.1} parent=0 // pred_fallthru
    _
  %v20 = vld [vmem:[%s1] sm:$0xff]
  %v21 = vld [vmem:[%s1 + $0x8] sm:$0xff]
  %v22 = vld [vmem:[%s1 + $0x10] sm:$0xff]
  %v23 = vld [vmem:[%s1 + $0x18] sm:$0xff]
  %v24 = vld [vmem:[%s0] sm:$0xff]
  %v25 = vld [vmem:[%s0 + $0x8] sm:$0xff]
  %v26 = vld [vmem:[%s2] sm:$0xff]
  %v27 = vld [vmem:[%s2 + $0x8] sm:$0xff]
  %v28 = vld [vmem:[%s2 + $0x10] sm:$0xff]
  %v29 = vld [vmem:[%s2 + $0x18] sm:$0xff]
  %31 = vset.pattern.permute.xlu0 0
  %32 = vperm.xlu0 %31, %v26
  %v33 = vpop.permute.xlu0 %32
  %36 = vset.pattern.permute.xlu0 0
  %37 = vperm.xlu0 %36, %v27
  %v38 = vpop.permute.xlu0 %37
  %41 = vset.pattern.permute.xlu0 0
  %42 = vperm.xlu0 %41, %v28
  %v43 = vpop.permute.xlu0 %42
  %46 = vset.pattern.permute.xlu0 0
  %47 = vperm.xlu0 %46, %v29
  %v48 = vpop.permute.xlu0 %47
  %vm50 = vcmask 130048
  %v52 = vsel %vm50, %v20, 0
  %v55 = vsel %vm50, %v21, 0
  %v58 = vsel %vm50, %v22, 0
  %v61 = vsel %vm50, %v23, 0
  %63 = vmatprep.subr.mxu0 0.0
  %64 = vmatpush1.msra.mxu0 %v24
  %65 = vmatprep.subr.mxu0 0.0
  %66 = vmatpush1.msra.mxu0 %v25
  %67 = vmatprep.subr.mxu0 0.0
  %68 = vmatpush1.msra.mxu0 0.0
  %69 = vmatprep.subr.mxu0 0.0
  %70 = vmatpush1.msra.mxu0 0.0
  %71 = vmatprep.subr.mxu0 0.0
  %72 = vmatpush1.msra.mxu0 0.0
  %73 = vmatprep.subr.mxu0 0.0
  %74 = vmatpush1.msra.mxu0 0.0
  %75 = vmatprep.subr.mxu0 0.0
  %76 = vmatpush1.msra.mxu0 0.0
  %77 = vmatprep.subr.mxu0 0.0
  %78 = vmatpush1.msra.mxu0 0.0
  %79 = vmatprep.subr.mxu0 0.0
  %80 = vmatpush1.msra.mxu0 0.0
  %81 = vmatprep.subr.mxu0 0.0
  %82 = vmatpush1.msra.mxu0 0.0
  %83 = vmatprep.subr.mxu0 0.0
  %84 = vmatpush1.msra.mxu0 0.0
  %85 = vmatprep.subr.mxu0 0.0
  %86 = vmatpush1.msra.mxu0 0.0
  %87 = vmatprep.subr.mxu0 0.0
  %88 = vmatpush1.msra.mxu0 0.0
  %89 = vmatprep.subr.mxu0 0.0
  %90 = vmatpush1.msra.mxu0 0.0
  %91 = vmatprep.subr.mxu0 0.0
  %92 = vmatpush1.msra.mxu0 0.0
  %93 = vmatprep.subr.mxu0 0.0
  %94 = vmatpush1.msra.mxu0 0.0
  %95 = vmatprep.subr.mxu0 0.0
  %96 = vmatpush1.msra.mxu0 0.0
  %97 = vmatprep.subr.mxu0 0.0
  %98 = vmatpush1.msra.mxu0 0.0
  %99 = vmatprep.subr.mxu0 0.0
  %100 = vmatpush1.msra.mxu0 0.0
  %101 = vmatprep.subr.mxu0 0.0
  %102 = vmatpush1.msra.mxu0 0.0
  %103 = vmatprep.subr.mxu0 0.0
  %104 = vmatpush1.msra.mxu0 0.0
  %105 = vmatprep.subr.mxu0 0.0
  %106 = vmatpush1.msra.mxu0 0.0
  %107 = vmatprep.subr.mxu0 0.0
  %108 = vmatpush1.msra.mxu0 0.0
  %109 = vmatprep.subr.mxu0 0.0
  %110 = vmatpush1.msra.mxu0 0.0
  %111 = vmatprep.subr.mxu0 0.0
  %112 = vmatpush1.msra.mxu0 0.0
  %113 = vmatprep.subr.mxu0 0.0
  %114 = vmatpush1.msra.mxu0 0.0
  %115 = vmatprep.subr.mxu0 0.0
  %116 = vmatpush1.msra.mxu0 0.0
  %117 = vmatprep.subr.mxu0 0.0
  %118 = vmatpush1.msra.mxu0 0.0
  %119 = vmatprep.subr.mxu0 0.0
  %120 = vmatpush1.msra.mxu0 0.0
  %121 = vmatprep.subr.mxu0 0.0
  %122 = vmatpush1.msra.mxu0 0.0
  %123 = vmatprep.subr.mxu0 0.0
  %124 = vmatpush1.msra.mxu0 0.0
  %125 = vmatprep.subr.mxu0 0.0
  %126 = vmatpush1.msra.mxu0 0.0
  %127 = vmatprep.mubr.f32.mxu0 0.0
  %128 = vmatmul.mubr.f32.gmra.mrb[0].mxu0 %v52
  %v129 = vpop.f32.mrb[0].mxu0
  %v130 = vadd.f32 %v33, %v129
  %v131 = vpop.f32.mrb[0].mxu0
  %132 = vmatprep.mubr.f32.mxu0 0.0
  %133 = vmatmul.mubr.f32.gmra.mrb[0].mxu0 %v55
  %v134 = vpop.f32.mrb[0].mxu0
  %v135 = vadd.f32 %v38, %v134
  %v136 = vpop.f32.mrb[0].mxu0
  %137 = vmatprep.mubr.f32.mxu0 0.0
  %138 = vmatmul.mubr.f32.gmra.mrb[0].mxu0 %v58
  %v139 = vpop.f32.mrb[0].mxu0
  %v140 = vadd.f32 %v43, %v139
  %v141 = vpop.f32.mrb[0].mxu0
  %142 = vmatprep.mubr.f32.mxu0 0.0
  %143 = vmatmul.mubr.f32.gmra.mrb[0].mxu0 %v61
  %v144 = vpop.f32.mrb[0].mxu0
  %v145 = vadd.f32 %v48, %v144
  %v146 = vpop.f32.mrb[0].mxu0
  %147 = vdwg.mxu0
  %v148 = vmax.f32 %v130, 0.0
  %v149 = vmax.f32 %v135, 0.0
  %v150 = vmax.f32 %v140, 0.0
  %v151 = vmax.f32 %v145, 0.0
  %v152 = vld [vmem:[%s3] sm:$0xf]
  %v153 = vld [vmem:[%s4] sm:$0xf]
  %155 = vset.pattern.permute.xlu0 0
  %156 = vperm.xlu0 %155, %v153
  %v157 = vpop.permute.xlu0 %156
  %vm159 = vcmask 261120
  %v161 = vsel %vm159, %v152, 0
  %163 = vmatprep.subr.mxu0 0.0
  %164 = vmatpush1.msra.mxu0 %v148
  %165 = vmatprep.subr.mxu0 0.0
  %166 = vmatpush1.msra.mxu0 %v149
  %167 = vmatprep.subr.mxu0 0.0
  %168 = vmatpush1.msra.mxu0 %v150
  %169 = vmatprep.subr.mxu0 0.0
  %170 = vmatpush1.msra.mxu0 %v151
  %171 = vmatprep.subr.mxu0 0.0
  %172 = vmatpush1.msra.mxu0 0.0
  %173 = vmatprep.subr.mxu0 0.0
  %174 = vmatpush1.msra.mxu0 0.0
  %175 = vmatprep.subr.mxu0 0.0
  %176 = vmatpush1.msra.mxu0 0.0
  %177 = vmatprep.subr.mxu0 0.0
  %178 = vmatpush1.msra.mxu0 0.0
  %179 = vmatprep.subr.mxu0 0.0
  %180 = vmatpush1.msra.mxu0 0.0
  %181 = vmatprep.subr.mxu0 0.0
  %182 = vmatpush1.msra.mxu0 0.0
  %183 = vmatprep.subr.mxu0 0.0
  %184 = vmatpush1.msra.mxu0 0.0
  %185 = vmatprep.subr.mxu0 0.0
  %186 = vmatpush1.msra.mxu0 0.0
  %187 = vmatprep.subr.mxu0 0.0
  %188 = vmatpush1.msra.mxu0 0.0
  %189 = vmatprep.subr.mxu0 0.0
  %190 = vmatpush1.msra.mxu0 0.0
  %191 = vmatprep.subr.mxu0 0.0
  %192 = vmatpush1.msra.mxu0 0.0
  %193 = vmatprep.subr.mxu0 0.0
  %194 = vmatpush1.msra.mxu0 0.0
  %195 = vmatprep.subr.mxu0 0.0
  %196 = vmatpush1.msra.mxu0 0.0
  %197 = vmatprep.subr.mxu0 0.0
  %198 = vmatpush1.msra.mxu0 0.0
  %199 = vmatprep.subr.mxu0 0.0
  %200 = vmatpush1.msra.mxu0 0.0
  %201 = vmatprep.subr.mxu0 0.0
  %202 = vmatpush1.msra.mxu0 0.0
  %203 = vmatprep.subr.mxu0 0.0
  %204 = vmatpush1.msra.mxu0 0.0
  %205 = vmatprep.subr.mxu0 0.0
  %206 = vmatpush1.msra.mxu0 0.0
  %207 = vmatprep.subr.mxu0 0.0
  %208 = vmatpush1.msra.mxu0 0.0
  %209 = vmatprep.subr.mxu0 0.0
  %210 = vmatpush1.msra.mxu0 0.0
  %211 = vmatprep.subr.mxu0 0.0
  %212 = vmatpush1.msra.mxu0 0.0
  %213 = vmatprep.subr.mxu0 0.0
  %214 = vmatpush1.msra.mxu0 0.0
  %215 = vmatprep.subr.mxu0 0.0
  %216 = vmatpush1.msra.mxu0 0.0
  %217 = vmatprep.subr.mxu0 0.0
  %218 = vmatpush1.msra.mxu0 0.0
  %219 = vmatprep.subr.mxu0 0.0
  %220 = vmatpush1.msra.mxu0 0.0
  %221 = vmatprep.subr.mxu0 0.0
  %222 = vmatpush1.msra.mxu0 0.0
  %223 = vmatprep.subr.mxu0 0.0
  %224 = vmatpush1.msra.mxu0 0.0
  %225 = vmatprep.subr.mxu0 0.0
  %226 = vmatpush1.msra.mxu0 0.0
  %227 = vmatprep.mubr.f32.mxu0 0.0
  %228 = vmatmul.mubr.f32.gmra.mrb[0].mxu0 %v161
  %v229 = vpop.f32.mrb[0].mxu0
  %v230 = vadd.f32 %v157, %v229
  %v231 = vpop.f32.mrb[0].mxu0
  %232 = vdwg.mxu0
  %233 = vst [vmem:[%s5] sm:$0xf] %v230
  // Predicated region
  $region22: #{edge_block_forward.1} parent=0 // pred_check
    _
  $region23: #{edge_block_forward.1} parent=0 // pred_check_branch
    %235 = sbr.rel (0) target = $region25
  $region24: #{edge_block_forward.1} parent=0 // pred_region
    _
  $region25: #{edge_block_forward.1} parent=0 // pred_fallthru
    _
  // Predicated region
  $region26: #{edge_block_forward.1} parent=0 // pred_check
    _
  $region27: #{edge_block_forward.1} parent=0 // pred_check_branch
    %237 = sbr.rel (0) target = $region29
  $region28: #{edge_block_forward.1} parent=0 // pred_region
    _
  $region29: #{edge_block_forward.1} parent=0 // pred_fallthru
    _

</llo_original>
